<compile_context>
chip_gen: v7x
topology: tpu7x:2x2x1
jax: 0.10.0
libtpu: 0.0.40
codegen_flags: <defaults>
</compile_context>

<pallas_src>
import jax
import jax.numpy as jnp
from jax.experimental import pallas as pl
from jax.experimental.pallas import tpu as pltpu

LN_EPS = 1e-5  # matches torch.nn.LayerNorm default


def _round_up(x, m):
    return (x + m - 1) // m * m


# ---------------------------------------------------------------------------
# Fused kernel: encoder -> gather(es[inp]) -> LayerNorm -> Linear
# ---------------------------------------------------------------------------
def _discriminator_kernel(
    inp_ref,                 # SMEM [B_pad] int32 node ids
    a_ref, x_ref,            # VMEM [N, N], [N, F]
    w_enc_ref, b_enc_ref,    # VMEM [F, D], [1, D]
    gamma_ref, beta_ref,     # VMEM [1, D], [1, D]
    wc_ref, bc_ref,          # VMEM [D, C_pad], [1, C_pad]
    out_ref,                 # VMEM [B_pad, C_pad] (lane-dense, zero-padded cols)
    es_ref, g_ref,           # VMEM scratch [N, D], [B_pad, D]
):
    n = es_ref.shape[0]

    # ---- GBNEncoder (single layer):  es = relu(A @ (X @ W_enc) + b_enc) ----
    xw = jnp.dot(x_ref[...], w_enc_ref[...], preferred_element_type=jnp.float32)
    h = jnp.dot(a_ref[...], xw, preferred_element_type=jnp.float32) + b_enc_ref[...]
    es_ref[...] = jnp.maximum(h, 0.0)

    # ---- Row gather es[inp] entirely in VMEM (indices read from SMEM) ----
    b_pad = g_ref.shape[0]
    for i in range(b_pad):  # B is tiny and static -> fully unrolled
        idx = inp_ref[i]
        idx = jnp.minimum(jnp.maximum(idx, 0), n - 1)  # clamp (JAX gather semantics)
        g_ref[pl.ds(i, 1), :] = es_ref[pl.ds(idx, 1), :]

    # ---- LNClassifier: LayerNorm over D, then Linear(D -> C_pad) ----
    xg = g_ref[...]
    mean = jnp.mean(xg, axis=-1, keepdims=True)
    cen = xg - mean
    var = jnp.mean(cen * cen, axis=-1, keepdims=True)      # biased variance (torch LN)
    xn = cen * jax.lax.rsqrt(var + LN_EPS)
    xn = xn * gamma_ref[...] + beta_ref[...]
    out_ref[...] = (
        jnp.dot(xn, wc_ref[...], preferred_element_type=jnp.float32) + bc_ref[...]
    )


# ---------------------------------------------------------------------------
# Discriminator forward (wrapper: padding + single pallas_call + slice)
# ---------------------------------------------------------------------------
def discriminator_forward(params, graph_data, inp):
    if inp is None:
        raise ValueError("inputs should be a tensor")

    adj, x = graph_data
    n = adj.shape[0]
    f = x.shape[1]
    d = params["w_enc"].shape[1]
    c = params["w_cls"].shape[1]
    b = inp.shape[0]

    b_pad = _round_up(max(b, 8), 8)           # sublane-aligned batch
    c_pad = _round_up(max(c, 128), 128)       # lane-dense output width

    # zero-padded classifier weights/bias -> padded logits columns are exactly 0
    wc_pad = jnp.zeros((d, c_pad), jnp.float32).at[:, :c].set(params["w_cls"])
    bc_pad = jnp.zeros((1, c_pad), jnp.float32).at[:, :c].set(params["b_cls"])
    inp_pad = jnp.zeros((b_pad,), jnp.int32).at[:b].set(inp.astype(jnp.int32))

    vmem = pl.BlockSpec(memory_space=pltpu.MemorySpace.VMEM)
    smem = pl.BlockSpec(memory_space=pltpu.MemorySpace.SMEM)

    flops = (2 * n * f * d            # X @ W_enc
             + 2 * n * n * d          # A @ (XW)
             + 2 * b_pad * d * c_pad  # classifier matmul
             + 10 * b_pad * d)        # LayerNorm / ReLU-ish elementwise
    bytes_accessed = 4 * (n * n + n * f + f * d + 3 * d
                          + d * c_pad + c_pad + b_pad * c_pad) + 4 * b_pad
    cost = pl.CostEstimate(flops=flops, transcendentals=b_pad,
                           bytes_accessed=bytes_accessed)

    logits_pad = pl.pallas_call(
        _discriminator_kernel,
        out_shape=jax.ShapeDtypeStruct((b_pad, c_pad), jnp.float32),
        in_specs=[smem, vmem, vmem, vmem, vmem, vmem, vmem, vmem, vmem],
        out_specs=vmem,
        scratch_shapes=[
            pltpu.VMEM((n, d), jnp.float32),      # es (never leaves VMEM)
            pltpu.VMEM((b_pad, d), jnp.float32),  # gathered rows
        ],
        cost_estimate=cost,
    )(inp_pad, adj, x,
      params["w_enc"], params["b_enc"],
      params["ln_gamma"], params["ln_beta"],
      wc_pad, bc_pad)

    return logits_pad[:b, :c]


def init_params(key, feat_dim, layer_dim, n_class):
    k1, k2, _ = jax.random.split(key, 3)
    return {
        "w_enc": jax.random.normal(k1, (feat_dim, layer_dim), jnp.float32) * 0.1,
        "b_enc": jnp.zeros((1, layer_dim), jnp.float32),
        "ln_gamma": jnp.ones((1, layer_dim), jnp.float32),
        "ln_beta": jnp.zeros((1, layer_dim), jnp.float32),
        "w_cls": jax.random.normal(k2, (layer_dim, n_class), jnp.float32) * 0.1,
        "b_cls": jnp.zeros((1, n_class), jnp.float32),
    }


if __name__ == "__main__":
    # opt = {'n_layer': 1 (forced), 'layer_dim': 32, 'n_class': 4}
    N, FEAT, LAYER_DIM, N_CLASS, BATCH = 16, 32, 32, 4, 8

    key = jax.random.PRNGKey(0)
    k_adj, k_x, k_inp, k_p = jax.random.split(key, 4)

    # graph_data = (adjacency, node features)
    adj_raw = (jax.random.uniform(k_adj, (N, N)) > 0.5).astype(jnp.float32)
    adj = adj_raw + jnp.eye(N, dtype=jnp.float32)           # self-loops
    adj = adj / jnp.sum(adj, axis=-1, keepdims=True)        # row-normalize
    x = jax.random.normal(k_x, (N, FEAT), jnp.float32)

    inp = jax.random.randint(k_inp, (BATCH,), 0, N)         # node indices to classify
    params = init_params(k_p, FEAT, LAYER_DIM, N_CLASS)

    logits = discriminator_forward(params, (adj, x), inp)
    jax.block_until_ready(logits)

    # reference check in plain JAX
    es_ref = jnp.maximum(adj @ (x @ params["w_enc"]) + params["b_enc"], 0.0)
    g_ref = es_ref[inp]
    mu = jnp.mean(g_ref, axis=-1, keepdims=True)
    va = jnp.mean((g_ref - mu) ** 2, axis=-1, keepdims=True)
    xn = (g_ref - mu) * jax.lax.rsqrt(va + LN_EPS) * params["ln_gamma"] + params["ln_beta"]
    ref = xn @ params["w_cls"] + params["b_cls"]

    assert logits.shape == (BATCH, N_CLASS)
    assert logits.dtype == jnp.float32
    assert jnp.allclose(logits, ref, atol=1e-4, rtol=1e-4)
    print("KERNEL_OK")
</pallas_src>

<mosaic_0001>
module attributes {stable_mosaic.version = 11 : i64} {
  func.func @_discriminator_kernel(%arg0: memref<8xi32, #tpu.memory_space<smem>>, %arg1: memref<16x16xf32, #tpu.memory_space<vmem>>, %arg2: memref<16x32xf32, #tpu.memory_space<vmem>>, %arg3: memref<32x32xf32, #tpu.memory_space<vmem>>, %arg4: memref<1x32xf32, #tpu.memory_space<vmem>>, %arg5: memref<1x32xf32, #tpu.memory_space<vmem>>, %arg6: memref<1x32xf32, #tpu.memory_space<vmem>>, %arg7: memref<32x128xf32, #tpu.memory_space<vmem>>, %arg8: memref<1x128xf32, #tpu.memory_space<vmem>>, %arg9: memref<8x128xf32, #tpu.memory_space<vmem>>, %arg10: memref<16x32xf32, #tpu.memory_space<vmem>>, %arg11: memref<8x32xf32, #tpu.memory_space<vmem>>) attributes {dimension_semantics = [], scalar_prefetch = 0 : i64, scratch_operands = 2 : i64, tpu.core_type = #tpu.core_type<tc>} {
    %c0 = arith.constant 0 : index
    %c0_0 = arith.constant 0 : index
    %0 = vector.load %arg2[%c0, %c0_0] : memref<16x32xf32, #tpu.memory_space<vmem>>, vector<16x32xf32>
    %c0_1 = arith.constant 0 : index
    %c0_2 = arith.constant 0 : index
    %1 = vector.load %arg3[%c0_1, %c0_2] : memref<32x32xf32, #tpu.memory_space<vmem>>, vector<32x32xf32>
    %cst = arith.constant dense<0.000000e+00> : vector<16x32xf32>
    %2 = tpu.matmul %0, %1, %cst {dimension_numbers = #tpu.dot_dimension_numbers<[1], [0], [0], [1], [0, 0, 1, 1], [], []>} : vector<16x32xf32>, vector<32x32xf32>, vector<16x32xf32> -> vector<16x32xf32>
    %c0_3 = arith.constant 0 : index
    %c0_4 = arith.constant 0 : index
    %3 = vector.load %arg1[%c0_3, %c0_4] : memref<16x16xf32, #tpu.memory_space<vmem>>, vector<16x16xf32>
    %cst_5 = arith.constant dense<0.000000e+00> : vector<16x32xf32>
    %4 = tpu.matmul %3, %2, %cst_5 {dimension_numbers = #tpu.dot_dimension_numbers<[1], [0], [0], [1], [0, 0, 1, 1], [], []>} : vector<16x16xf32>, vector<16x32xf32>, vector<16x32xf32> -> vector<16x32xf32>
    %c0_6 = arith.constant 0 : index
    %c0_7 = arith.constant 0 : index
    %5 = vector.load %arg4[%c0_6, %c0_7] : memref<1x32xf32, #tpu.memory_space<vmem>>, vector<1x32xf32>
    %6 = vector.broadcast %5 : vector<1x32xf32> to vector<16x32xf32>
    %7 = arith.addf %4, %6 : vector<16x32xf32>
    %cst_8 = arith.constant 0.000000e+00 : f32
    %8 = vector.broadcast %cst_8 : f32 to vector<16x32xf32>
    %9 = arith.maximumf %7, %8 : vector<16x32xf32>
    %c0_9 = arith.constant 0 : index
    %c0_10 = arith.constant 0 : index
    %10 = vector.load %arg10[%c0_9, %c0_10] : memref<16x32xf32, #tpu.memory_space<vmem>>, vector<16x32xf32>
    tpu.vector_store %arg10[%c0_9, %c0_10], %9 {strides = array<i32>} : memref<16x32xf32, #tpu.memory_space<vmem>>, vector<16x32xf32>,
    %c0_11 = arith.constant 0 : index
    %11 = memref.load %arg0[%c0_11] : memref<8xi32, #tpu.memory_space<smem>>
    %c0_i32 = arith.constant 0 : i32
    %12 = arith.maxsi %11, %c0_i32 : i32
    %c15_i32 = arith.constant 15 : i32
    %13 = arith.minsi %12, %c15_i32 : i32
    %14 = arith.index_cast %13 : i32 to index
    %c0_12 = arith.constant 0 : index
    %15 = vector.load %arg10[%14, %c0_12] : memref<16x32xf32, #tpu.memory_space<vmem>>, vector<1x32xf32>
    %c0_13 = arith.constant 0 : index
    %c0_14 = arith.constant 0 : index
    %16 = vector.load %arg11[%c0_13, %c0_14] : memref<8x32xf32, #tpu.memory_space<vmem>>, vector<1x32xf32>
    tpu.vector_store %arg11[%c0_13, %c0_14], %15 {strides = array<i32>} : memref<8x32xf32, #tpu.memory_space<vmem>>, vector<1x32xf32>,
    %c1 = arith.constant 1 : index
    %17 = memref.load %arg0[%c1] : memref<8xi32, #tpu.memory_space<smem>>
    %c0_i32_15 = arith.constant 0 : i32
    %18 = arith.maxsi %17, %c0_i32_15 : i32
    %c15_i32_16 = arith.constant 15 : i32
    %19 = arith.minsi %18, %c15_i32_16 : i32
    %20 = arith.index_cast %19 : i32 to index
    %c0_17 = arith.constant 0 : index
    %21 = vector.load %arg10[%20, %c0_17] : memref<16x32xf32, #tpu.memory_space<vmem>>, vector<1x32xf32>
    %c1_18 = arith.constant 1 : index
    %c0_19 = arith.constant 0 : index
    %22 = vector.load %arg11[%c1_18, %c0_19] : memref<8x32xf32, #tpu.memory_space<vmem>>, vector<1x32xf32>
    tpu.vector_store %arg11[%c1_18, %c0_19], %21 {strides = array<i32>} : memref<8x32xf32, #tpu.memory_space<vmem>>, vector<1x32xf32>,
    %c2 = arith.constant 2 : index
    %23 = memref.load %arg0[%c2] : memref<8xi32, #tpu.memory_space<smem>>
    %c0_i32_20 = arith.constant 0 : i32
    %24 = arith.maxsi %23, %c0_i32_20 : i32
    %c15_i32_21 = arith.constant 15 : i32
    %25 = arith.minsi %24, %c15_i32_21 : i32
    %26 = arith.index_cast %25 : i32 to index
    %c0_22 = arith.constant 0 : index
    %27 = vector.load %arg10[%26, %c0_22] : memref<16x32xf32, #tpu.memory_space<vmem>>, vector<1x32xf32>
    %c2_23 = arith.constant 2 : index
    %c0_24 = arith.constant 0 : index
    %28 = vector.load %arg11[%c2_23, %c0_24] : memref<8x32xf32, #tpu.memory_space<vmem>>, vector<1x32xf32>
    tpu.vector_store %arg11[%c2_23, %c0_24], %27 {strides = array<i32>} : memref<8x32xf32, #tpu.memory_space<vmem>>, vector<1x32xf32>,
    %c3 = arith.constant 3 : index
    %29 = memref.load %arg0[%c3] : memref<8xi32, #tpu.memory_space<smem>>
    %c0_i32_25 = arith.constant 0 : i32
    %30 = arith.maxsi %29, %c0_i32_25 : i32
    %c15_i32_26 = arith.constant 15 : i32
    %31 = arith.minsi %30, %c15_i32_26 : i32
    %32 = arith.index_cast %31 : i32 to index
    %c0_27 = arith.constant 0 : index
    %33 = vector.load %arg10[%32, %c0_27] : memref<16x32xf32, #tpu.memory_space<vmem>>, vector<1x32xf32>
    %c3_28 = arith.constant 3 : index
    %c0_29 = arith.constant 0 : index
    %34 = vector.load %arg11[%c3_28, %c0_29] : memref<8x32xf32, #tpu.memory_space<vmem>>, vector<1x32xf32>
    tpu.vector_store %arg11[%c3_28, %c0_29], %33 {strides = array<i32>} : memref<8x32xf32, #tpu.memory_space<vmem>>, vector<1x32xf32>,
    %c4 = arith.constant 4 : index
    %35 = memref.load %arg0[%c4] : memref<8xi32, #tpu.memory_space<smem>>
    %c0_i32_30 = arith.constant 0 : i32
    %36 = arith.maxsi %35, %c0_i32_30 : i32
    %c15_i32_31 = arith.constant 15 : i32
    %37 = arith.minsi %36, %c15_i32_31 : i32
    %38 = arith.index_cast %37 : i32 to index
    %c0_32 = arith.constant 0 : index
    %39 = vector.load %arg10[%38, %c0_32] : memref<16x32xf32, #tpu.memory_space<vmem>>, vector<1x32xf32>
    %c4_33 = arith.constant 4 : index
    %c0_34 = arith.constant 0 : index
    %40 = vector.load %arg11[%c4_33, %c0_34] : memref<8x32xf32, #tpu.memory_space<vmem>>, vector<1x32xf32>
    tpu.vector_store %arg11[%c4_33, %c0_34], %39 {strides = array<i32>} : memref<8x32xf32, #tpu.memory_space<vmem>>, vector<1x32xf32>,
    %c5 = arith.constant 5 : index
    %41 = memref.load %arg0[%c5] : memref<8xi32, #tpu.memory_space<smem>>
    %c0_i32_35 = arith.constant 0 : i32
    %42 = arith.maxsi %41, %c0_i32_35 : i32
    %c15_i32_36 = arith.constant 15 : i32
    %43 = arith.minsi %42, %c15_i32_36 : i32
    %44 = arith.index_cast %43 : i32 to index
    %c0_37 = arith.constant 0 : index
    %45 = vector.load %arg10[%44, %c0_37] : memref<16x32xf32, #tpu.memory_space<vmem>>, vector<1x32xf32>
    %c5_38 = arith.constant 5 : index
    %c0_39 = arith.constant 0 : index
    %46 = vector.load %arg11[%c5_38, %c0_39] : memref<8x32xf32, #tpu.memory_space<vmem>>, vector<1x32xf32>
    tpu.vector_store %arg11[%c5_38, %c0_39], %45 {strides = array<i32>} : memref<8x32xf32, #tpu.memory_space<vmem>>, vector<1x32xf32>,
    %c6 = arith.constant 6 : index
    %47 = memref.load %arg0[%c6] : memref<8xi32, #tpu.memory_space<smem>>
    %c0_i32_40 = arith.constant 0 : i32
    %48 = arith.maxsi %47, %c0_i32_40 : i32
    %c15_i32_41 = arith.constant 15 : i32
    %49 = arith.minsi %48, %c15_i32_41 : i32
    %50 = arith.index_cast %49 : i32 to index
    %c0_42 = arith.constant 0 : index
    %51 = vector.load %arg10[%50, %c0_42] : memref<16x32xf32, #tpu.memory_space<vmem>>, vector<1x32xf32>
    %c6_43 = arith.constant 6 : index
    %c0_44 = arith.constant 0 : index
    %52 = vector.load %arg11[%c6_43, %c0_44] : memref<8x32xf32, #tpu.memory_space<vmem>>, vector<1x32xf32>
    tpu.vector_store %arg11[%c6_43, %c0_44], %51 {strides = array<i32>} : memref<8x32xf32, #tpu.memory_space<vmem>>, vector<1x32xf32>,
    %c7 = arith.constant 7 : index
    %53 = memref.load %arg0[%c7] : memref<8xi32, #tpu.memory_space<smem>>
    %c0_i32_45 = arith.constant 0 : i32
    %54 = arith.maxsi %53, %c0_i32_45 : i32
    %c15_i32_46 = arith.constant 15 : i32
    %55 = arith.minsi %54, %c15_i32_46 : i32
    %56 = arith.index_cast %55 : i32 to index
    %c0_47 = arith.constant 0 : index
    %57 = vector.load %arg10[%56, %c0_47] : memref<16x32xf32, #tpu.memory_space<vmem>>, vector<1x32xf32>
    %c7_48 = arith.constant 7 : index
    %c0_49 = arith.constant 0 : index
    %58 = vector.load %arg11[%c7_48, %c0_49] : memref<8x32xf32, #tpu.memory_space<vmem>>, vector<1x32xf32>
    tpu.vector_store %arg11[%c7_48, %c0_49], %57 {strides = array<i32>} : memref<8x32xf32, #tpu.memory_space<vmem>>, vector<1x32xf32>,
    %c0_50 = arith.constant 0 : index
    %c0_51 = arith.constant 0 : index
    %59 = vector.load %arg11[%c0_50, %c0_51] : memref<8x32xf32, #tpu.memory_space<vmem>>, vector<8x32xf32>
    %cst_52 = arith.constant dense<0.000000e+00> : vector<8xf32>
    %60 = vector.multi_reduction <add>, %59, %cst_52 [1] : vector<8x32xf32> to vector<8xf32>
    %61 = vector.shape_cast %60 : vector<8xf32> to vector<8x1xf32>
    %cst_53 = arith.constant 3.200000e+01 : f32
    %62 = vector.broadcast %cst_53 : f32 to vector<8x1xf32>
    %63 = arith.divf %61, %62 : vector<8x1xf32>
    %64 = vector.broadcast %63 : vector<8x1xf32> to vector<8x32xf32>
    %65 = arith.subf %59, %64 : vector<8x32xf32>
    %66 = arith.mulf %65, %65 : vector<8x32xf32>
    %cst_54 = arith.constant dense<0.000000e+00> : vector<8xf32>
    %67 = vector.multi_reduction <add>, %66, %cst_54 [1] : vector<8x32xf32> to vector<8xf32>
    %68 = vector.shape_cast %67 : vector<8xf32> to vector<8x1xf32>
    %cst_55 = arith.constant 3.200000e+01 : f32
    %69 = vector.broadcast %cst_55 : f32 to vector<8x1xf32>
    %70 = arith.divf %68, %69 : vector<8x1xf32>
    %cst_56 = arith.constant 9.99999974E-6 : f32
    %71 = vector.broadcast %cst_56 : f32 to vector<8x1xf32>
    %72 = arith.addf %70, %71 : vector<8x1xf32>
    %73 = math.rsqrt %72 : vector<8x1xf32>
    %74 = vector.broadcast %73 : vector<8x1xf32> to vector<8x32xf32>
    %75 = arith.mulf %65, %74 : vector<8x32xf32>
    %c0_57 = arith.constant 0 : index
    %c0_58 = arith.constant 0 : index
    %76 = vector.load %arg5[%c0_57, %c0_58] : memref<1x32xf32, #tpu.memory_space<vmem>>, vector<1x32xf32>
    %77 = vector.broadcast %76 : vector<1x32xf32> to vector<8x32xf32>
    %78 = arith.mulf %75, %77 : vector<8x32xf32>
    %c0_59 = arith.constant 0 : index
    %c0_60 = arith.constant 0 : index
    %79 = vector.load %arg6[%c0_59, %c0_60] : memref<1x32xf32, #tpu.memory_space<vmem>>, vector<1x32xf32>
    %80 = vector.broadcast %79 : vector<1x32xf32> to vector<8x32xf32>
    %81 = arith.addf %78, %80 : vector<8x32xf32>
    %c0_61 = arith.constant 0 : index
    %c0_62 = arith.constant 0 : index
    %82 = vector.load %arg7[%c0_61, %c0_62] : memref<32x128xf32, #tpu.memory_space<vmem>>, vector<32x128xf32>
    %cst_63 = arith.constant dense<0.000000e+00> : vector<8x128xf32>
    %83 = tpu.matmul %81, %82, %cst_63 {dimension_numbers = #tpu.dot_dimension_numbers<[1], [0], [0], [1], [0, 0, 1, 1], [], []>} : vector<8x32xf32>, vector<32x128xf32>, vector<8x128xf32> -> vector<8x128xf32>
    %c0_64 = arith.constant 0 : index
    %c0_65 = arith.constant 0 : index
    %84 = vector.load %arg8[%c0_64, %c0_65] : memref<1x128xf32, #tpu.memory_space<vmem>>, vector<1x128xf32>
    %85 = vector.broadcast %84 : vector<1x128xf32> to vector<8x128xf32>
    %86 = arith.addf %83, %85 : vector<8x128xf32>
    %c0_66 = arith.constant 0 : index
    %c0_67 = arith.constant 0 : index
    %87 = vector.load %arg9[%c0_66, %c0_67] : memref<8x128xf32, #tpu.memory_space<vmem>>, vector<8x128xf32>
    tpu.vector_store %arg9[%c0_66, %c0_67], %86 {strides = array<i32>} : memref<8x128xf32, #tpu.memory_space<vmem>>, vector<8x128xf32>,
    return
  }
}

</mosaic_0001>

<llo_original>
// kernel: tpu_custom_call.1
$region0: #{tpu_custom_call.1}
  #allocation0 [shape = 'u32[]', space=smem, size = 0x4, offset = 0x4, fixed_abs, tag = 'smem constant byte address 0x4 - core index']
  #allocation1 [shape = 'u32[144,128]{1,0:T(1,128)}', space=vmem, size = 0x12000, scoped, tag = 'internal scratch']
  #allocation2 [shape = 'f32[16,32]{1,0:T(8,128)}', space=vmem, size = 0x2000, scoped, tag = 'scratch operand']
  #allocation3 [shape = 'f32[8,32]{1,0:T(8,128)}', space=vmem, size = 0x1000, scoped, tag = 'scratch operand']
  %s0 = inlined_call_operand.hbm [shape: s32[8], index: 0, kind: input, shape index: {}]
  %s1 = inlined_call_operand.hbm [shape: f32[16,16], index: 1, kind: input, shape index: {}]
  %s2 = inlined_call_operand.hbm [shape: f32[16,32], index: 2, kind: input, shape index: {}]
  %s3 = inlined_call_operand.hbm [shape: f32[32,32], index: 3, kind: input, shape index: {}]
  %s4 = inlined_call_operand.vmem [shape: f32[1,32], index: 4, kind: input, shape index: {}]
  %s5 = inlined_call_operand.vmem [shape: f32[1,32], index: 5, kind: input, shape index: {}]
  %s6 = inlined_call_operand.vmem [shape: f32[1,32], index: 6, kind: input, shape index: {}]
  %s7 = inlined_call_operand.hbm [shape: f32[32,128], index: 7, kind: input, shape index: {}]
  %s8 = inlined_call_operand.vmem [shape: f32[1,128], index: 8, kind: input, shape index: {}]
  %s9 = inlined_call_operand.hbm [shape: f32[8,128], index: 9, kind: output, shape index: {}]
  %s10 = sld [smem:[#allocation0]]
  $region66: #{tpu_custom_call.1} parent=0
    _
  %s12 = ssub.s32 1, %s10
  %s13 = scalar_select 0, %s12, %s10
  $region1: #{tpu_custom_call.1} parent=0
    #allocation4 [shape = 'u8[512]{0}', space=smem, size = 0x200, scoped, tag = 'input window, operand 0, single buffered']
    #allocation5 [shape = 's32[1]{0}', space=sflag, size = 0x4, scoped, tag = 'scoped memory for tpu_custom_call.1']
    #allocation6 [shape = 's32[1]{0}', space=sflag, size = 0x4, scoped, tag = 'scoped memory for tpu_custom_call.1']
    #allocation7 [shape = 's32[1]{0}', space=sflag, size = 0x4, scoped, tag = 'scoped memory for tpu_custom_call.1']
    #allocation8 [shape = 'u8[8192]{0}', space=vmem, size = 0x2000, scoped, tag = 'input window, operand 1, single buffered']
    #allocation9 [shape = 'u8[8192]{0}', space=vmem, size = 0x2000, scoped, tag = 'input window, operand 2, single buffered']
    #allocation10 [shape = 's32[1]{0}', space=sflag, size = 0x4, scoped, tag = 'scoped memory for tpu_custom_call.1']
    #allocation11 [shape = 'u8[16384]{0}', space=vmem, size = 0x4000, scoped, tag = 'input window, operand 3, single buffered']
    #allocation12 [shape = 'u8[16384]{0}', space=vmem, size = 0x4000, scoped, tag = 'input window, operand 7, single buffered']
    #allocation13 [shape = 's32[1]{0}', space=sflag, size = 0x4, scoped, tag = 'scoped memory for tpu_custom_call.1']
    #allocation14 [shape = 'u8[4096]{0}', space=vmem, size = 0x1000, scoped, tag = 'output window, operand 0, single buffered']
    %14 = vsyncpa [#allocation7], 0
    %15 = vsyncpa [#allocation5], 0
    %16 = vsyncpa [#allocation10], 0
    %17 = vsyncpa [#allocation13], 0
    %18 = vsyncpa [#allocation6], 0
    // Predicated region
    $region2: #{tpu_custom_call.1} parent=1 // pred_check
      _
    $region3: #{tpu_custom_call.1} parent=1 // pred_check_branch
      %20 = sbr.rel (0) target = $region5
    $region4: #{tpu_custom_call.1} parent=1 // pred_region
      %s22 = ssub.s32 16, 16
      %23 = vsyncadd [#allocation7], %s22
      %26 = dma.hbm_to_smem %s0, 16, [#allocation4], [#allocation7]
    $region5: #{tpu_custom_call.1} parent=1 // pred_fallthru
      _
    // Predicated region
    $region6: #{tpu_custom_call.1} parent=1 // pred_check
      _
    $region7: #{tpu_custom_call.1} parent=1 // pred_check_branch
      %28 = sbr.rel (0) target = $region9
    $region8: #{tpu_custom_call.1} parent=1 // pred_region
      %s30 = ssub.s32 256, 256
      %31 = vsyncadd [#allocation5], %s30
      %s32 = sshll.u32 [#allocation8], 4
      %s33 = int_to_ptr.vmem [resolvable:$true] %s32
      %38 = dma.hbm_to_vmem [thread:$0]  %s1, 256, %s33, [#allocation5], 128, 128, 8
    $region9: #{tpu_custom_call.1} parent=1 // pred_fallthru
      _
    // Predicated region
    $region10: #{tpu_custom_call.1} parent=1 // pred_check
      _
    $region11: #{tpu_custom_call.1} parent=1 // pred_check_branch
      %40 = sbr.rel (0) target = $region13
    $region12: #{tpu_custom_call.1} parent=1 // pred_region
      %s42 = ssub.s32 256, 256
      %43 = vsyncadd [#allocation10], %s42
      %s44 = sshll.u32 [#allocation9], 4
      %s45 = int_to_ptr.vmem [resolvable:$true] %s44
      %50 = dma.hbm_to_vmem [thread:$0]  %s2, 256, %s45, [#allocation10], 128, 128, 8
    $region13: #{tpu_custom_call.1} parent=1 // pred_fallthru
      _
    // Predicated region
    $region14: #{tpu_custom_call.1} parent=1 // pred_check
      _
    $region15: #{tpu_custom_call.1} parent=1 // pred_check_branch
      %52 = sbr.rel (0) target = $region17
    $region16: #{tpu_custom_call.1} parent=1 // pred_region
      %s54 = ssub.s32 512, 512
      %55 = vsyncadd [#allocation10], %s54
      %s56 = sshll.u32 [#allocation11], 4
      %s57 = int_to_ptr.vmem [resolvable:$true] %s56
      %62 = dma.hbm_to_vmem [thread:$0]  %s3, 512, %s57, [#allocation10], 128, 128, 8
    $region17: #{tpu_custom_call.1} parent=1 // pred_fallthru
      _
    // Predicated region
    $region18: #{tpu_custom_call.1} parent=1 // pred_check
      _
    $region19: #{tpu_custom_call.1} parent=1 // pred_check_branch
      %64 = sbr.rel (0) target = $region21
    $region20: #{tpu_custom_call.1} parent=1 // pred_region
      _
    $region21: #{tpu_custom_call.1} parent=1 // pred_fallthru
      _
    // Predicated region
    $region22: #{tpu_custom_call.1} parent=1 // pred_check
      _
    $region23: #{tpu_custom_call.1} parent=1 // pred_check_branch
      %66 = sbr.rel (0) target = $region25
    $region24: #{tpu_custom_call.1} parent=1 // pred_region
      _
    $region25: #{tpu_custom_call.1} parent=1 // pred_fallthru
      _
    // Predicated region
    $region26: #{tpu_custom_call.1} parent=1 // pred_check
      _
    $region27: #{tpu_custom_call.1} parent=1 // pred_check_branch
      %68 = sbr.rel (0) target = $region29
    $region28: #{tpu_custom_call.1} parent=1 // pred_region
      _
    $region29: #{tpu_custom_call.1} parent=1 // pred_fallthru
      _
    // Predicated region
    $region30: #{tpu_custom_call.1} parent=1 // pred_check
      _
    $region31: #{tpu_custom_call.1} parent=1 // pred_check_branch
      %70 = sbr.rel (0) target = $region33
    $region32: #{tpu_custom_call.1} parent=1 // pred_region
      %s72 = ssub.s32 512, 512
      %73 = vsyncadd [#allocation13], %s72
      %s74 = sshll.u32 [#allocation12], 4
      %s75 = int_to_ptr.vmem [resolvable:$true] %s74
      %80 = dma.hbm_to_vmem [thread:$0]  %s7, 512, %s75, [#allocation13], 128, 128, 8
    $region33: #{tpu_custom_call.1} parent=1 // pred_fallthru
      _
    // Predicated region
    $region34: #{tpu_custom_call.1} parent=1 // pred_check
      _
    $region35: #{tpu_custom_call.1} parent=1 // pred_check_branch
      %82 = sbr.rel (0) target = $region37
    $region36: #{tpu_custom_call.1} parent=1 // pred_region
      _
    $region37: #{tpu_custom_call.1} parent=1 // pred_fallthru
      _
    // Predicated region
    $region38: #{tpu_custom_call.1} parent=1 // pred_check
      _
    $region39: #{tpu_custom_call.1} parent=1 // pred_check_branch
      %84 = sbr.rel (0) target = $region41
    $region40: #{tpu_custom_call.1} parent=1 // pred_region
      %85 = dma.done [#allocation7], 16
    $region41: #{tpu_custom_call.1} parent=1 // pred_fallthru
      _
    // Predicated region
    $region42: #{tpu_custom_call.1} parent=1 // pred_check
      _
    $region43: #{tpu_custom_call.1} parent=1 // pred_check_branch
      %87 = sbr.rel (0) target = $region45
    $region44: #{tpu_custom_call.1} parent=1 // pred_region
      %88 = dma.done [#allocation5], 256
    $region45: #{tpu_custom_call.1} parent=1 // pred_fallthru
      _
    // Predicated region
    $region46: #{tpu_custom_call.1} parent=1 // pred_check
      _
    $region47: #{tpu_custom_call.1} parent=1 // pred_check_branch
      %90 = sbr.rel (0) target = $region49
    $region48: #{tpu_custom_call.1} parent=1 // pred_region
      %91 = dma.done [#allocation10], 256
    $region49: #{tpu_custom_call.1} parent=1 // pred_fallthru
      _
    // Predicated region
    $region50: #{tpu_custom_call.1} parent=1 // pred_check
      _
    $region51: #{tpu_custom_call.1} parent=1 // pred_check_branch
      %93 = sbr.rel (0) target = $region53
    $region52: #{tpu_custom_call.1} parent=1 // pred_region
      %94 = dma.done [#allocation10], 512
    $region53: #{tpu_custom_call.1} parent=1 // pred_fallthru
      _
    // Predicated region
    $region54: #{tpu_custom_call.1} parent=1 // pred_check
      _
    $region55: #{tpu_custom_call.1} parent=1 // pred_check_branch
      %96 = sbr.rel (0) target = $region57
    $region56: #{tpu_custom_call.1} parent=1 // pred_region
      %97 = dma.done [#allocation13], 512
    $region57: #{tpu_custom_call.1} parent=1 // pred_fallthru
      _
    %98 = sfence
    %v99 = vld [vmem:[#allocation9] sm:$0xff]
    %v100 = vld [vmem:[#allocation9 + $0x8] sm:$0xff]
    %v101 = vld [vmem:[#allocation11] sm:$0xff]
    %v102 = vld [vmem:[#allocation11 + $0x8] sm:$0xff]
    %v103 = vld [vmem:[#allocation11 + $0x10] sm:$0xff]
    %v104 = vld [vmem:[#allocation11 + $0x18] sm:$0xff]
    %vm105 = vcmask 261120
    %v107 = vsel %vm105, %v99, 0
    %v110 = vsel %vm105, %v100, 0
    %112 = vmatprep.subr.mxu0 0.0
    %113 = vmatpush1.msra.mxu0 %v101
    %114 = vmatprep.subr.mxu0 0.0
    %115 = vmatpush1.msra.mxu0 %v102
    %116 = vmatprep.subr.mxu0 0.0
    %117 = vmatpush1.msra.mxu0 %v103
    %118 = vmatprep.subr.mxu0 0.0
    %119 = vmatpush1.msra.mxu0 %v104
    %120 = vmatprep.subr.mxu0 0.0
    %121 = vmatpush1.msra.mxu0 0.0
    %122 = vmatprep.subr.mxu0 0.0
    %123 = vmatpush1.msra.mxu0 0.0
    %124 = vmatprep.subr.mxu0 0.0
    %125 = vmatpush1.msra.mxu0 0.0
    %126 = vmatprep.subr.mxu0 0.0
    %127 = vmatpush1.msra.mxu0 0.0
    %128 = vmatprep.subr.mxu0 0.0
    %129 = vmatpush1.msra.mxu0 0.0
    %130 = vmatprep.subr.mxu0 0.0
    %131 = vmatpush1.msra.mxu0 0.0
    %132 = vmatprep.subr.mxu0 0.0
    %133 = vmatpush1.msra.mxu0 0.0
    %134 = vmatprep.subr.mxu0 0.0
    %135 = vmatpush1.msra.mxu0 0.0
    %136 = vmatprep.subr.mxu0 0.0
    %137 = vmatpush1.msra.mxu0 0.0
    %138 = vmatprep.subr.mxu0 0.0
    %139 = vmatpush1.msra.mxu0 0.0
    %140 = vmatprep.subr.mxu0 0.0
    %141 = vmatpush1.msra.mxu0 0.0
    %142 = vmatprep.subr.mxu0 0.0
    %143 = vmatpush1.msra.mxu0 0.0
    %144 = vmatprep.subr.mxu0 0.0
    %145 = vmatpush1.msra.mxu0 0.0
    %146 = vmatprep.subr.mxu0 0.0
    %147 = vmatpush1.msra.mxu0 0.0
    %148 = vmatprep.subr.mxu0 0.0
    %149 = vmatpush1.msra.mxu0 0.0
    %150 = vmatprep.subr.mxu0 0.0
    %151 = vmatpush1.msra.mxu0 0.0
    %152 = vmatprep.subr.mxu0 0.0
    %153 = vmatpush1.msra.mxu0 0.0
    %154 = vmatprep.subr.mxu0 0.0
    %155 = vmatpush1.msra.mxu0 0.0
    %156 = vmatprep.subr.mxu0 0.0
    %157 = vmatpush1.msra.mxu0 0.0
    %158 = vmatprep.subr.mxu0 0.0
    %159 = vmatpush1.msra.mxu0 0.0
    %160 = vmatprep.subr.mxu0 0.0
    %161 = vmatpush1.msra.mxu0 0.0
    %162 = vmatprep.subr.mxu0 0.0
    %163 = vmatpush1.msra.mxu0 0.0
    %164 = vmatprep.subr.mxu0 0.0
    %165 = vmatpush1.msra.mxu0 0.0
    %166 = vmatprep.subr.mxu0 0.0
    %167 = vmatpush1.msra.mxu0 0.0
    %168 = vmatprep.subr.mxu0 0.0
    %169 = vmatpush1.msra.mxu0 0.0
    %170 = vmatprep.subr.mxu0 0.0
    %171 = vmatpush1.msra.mxu0 0.0
    %172 = vmatprep.subr.mxu0 0.0
    %173 = vmatpush1.msra.mxu0 0.0
    %174 = vmatprep.subr.mxu0 0.0
    %175 = vmatpush1.msra.mxu0 0.0
    %176 = vmatprep.mubr.f32.mxu0 0.0
    %177 = vmatmul.mubr.f32.gmra.mrb[0].mxu0 %v107
    %v178 = vpop.f32.mrb[0].mxu0
    %v179 = vadd.f32 0.0, %v178
    %v180 = vpop.f32.mrb[0].mxu0
    %181 = vmatprep.mubr.f32.mxu0 0.0
    %182 = vmatmul.mubr.f32.gmra.mrb[0].mxu0 %v110
    %v183 = vpop.f32.mrb[0].mxu0
    %v184 = vadd.f32 0.0, %v183
    %v185 = vpop.f32.mrb[0].mxu0
    %186 = vdwg.mxu0
    %v187 = vld [vmem:[#allocation8] sm:$0xff]
    %v188 = vld [vmem:[#allocation8 + $0x8] sm:$0xff]
    %v189 = vld [vmem:[%s4] sm:$0x1]
    %v191 = vlaneseq
    %v192 = vshrl.u32 %v191, 7
    %v193 = vsub.s32 0, %v192
    %v194 = vrot.slane %v189, %v193
    %vm196 = vcmask 130048
    %v198 = vsel %vm196, %v187, 0
    %v201 = vsel %vm196, %v188, 0
    %203 = vmatprep.subr.mxu0 0.0
    %204 = vmatpush1.msra.mxu0 %v179
    %205 = vmatprep.subr.mxu0 0.0
    %206 = vmatpush1.msra.mxu0 %v184
    %207 = vmatprep.subr.mxu0 0.0
    %208 = vmatpush1.msra.mxu0 0.0
    %209 = vmatprep.subr.mxu0 0.0
    %210 = vmatpush1.msra.mxu0 0.0
    %211 = vmatprep.subr.mxu0 0.0
    %212 = vmatpush1.msra.mxu0 0.0
    %213 = vmatprep.subr.mxu0 0.0
    %214 = vmatpush1.msra.mxu0 0.0
    %215 = vmatprep.subr.mxu0 0.0
    %216 = vmatpush1.msra.mxu0 0.0
    %217 = vmatprep.subr.mxu0 0.0
    %218 = vmatpush1.msra.mxu0 0.0
    %219 = vmatprep.subr.mxu0 0.0
    %220 = vmatpush1.msra.mxu0 0.0
    %221 = vmatprep.subr.mxu0 0.0
    %222 = vmatpush1.msra.mxu0 0.0
    %223 = vmatprep.subr.mxu0 0.0
    %224 = vmatpush1.msra.mxu0 0.0
    %225 = vmatprep.subr.mxu0 0.0
    %226 = vmatpush1.msra.mxu0 0.0
    %227 = vmatprep.subr.mxu0 0.0
    %228 = vmatpush1.msra.mxu0 0.0
    %229 = vmatprep.subr.mxu0 0.0
    %230 = vmatpush1.msra.mxu0 0.0
    %231 = vmatprep.subr.mxu0 0.0
    %232 = vmatpush1.msra.mxu0 0.0
    %233 = vmatprep.subr.mxu0 0.0
    %234 = vmatpush1.msra.mxu0 0.0
    %235 = vmatprep.subr.mxu0 0.0
    %236 = vmatpush1.msra.mxu0 0.0
    %237 = vmatprep.subr.mxu0 0.0
    %238 = vmatpush1.msra.mxu0 0.0
    %239 = vmatprep.subr.mxu0 0.0
    %240 = vmatpush1.msra.mxu0 0.0
    %241 = vmatprep.subr.mxu0 0.0
    %242 = vmatpush1.msra.mxu0 0.0
    %243 = vmatprep.subr.mxu0 0.0
    %244 = vmatpush1.msra.mxu0 0.0
    %245 = vmatprep.subr.mxu0 0.0
    %246 = vmatpush1.msra.mxu0 0.0
    %247 = vmatprep.subr.mxu0 0.0
    %248 = vmatpush1.msra.mxu0 0.0
    %249 = vmatprep.subr.mxu0 0.0
    %250 = vmatpush1.msra.mxu0 0.0
    %251 = vmatprep.subr.mxu0 0.0
    %252 = vmatpush1.msra.mxu0 0.0
    %253 = vmatprep.subr.mxu0 0.0
    %254 = vmatpush1.msra.mxu0 0.0
    %255 = vmatprep.subr.mxu0 0.0
    %256 = vmatpush1.msra.mxu0 0.0
    %257 = vmatprep.subr.mxu0 0.0
    %258 = vmatpush1.msra.mxu0 0.0
    %259 = vmatprep.subr.mxu0 0.0
    %260 = vmatpush1.msra.mxu0 0.0
    %261 = vmatprep.subr.mxu0 0.0
    %262 = vmatpush1.msra.mxu0 0.0
    %263 = vmatprep.subr.mxu0 0.0
    %264 = vmatpush1.msra.mxu0 0.0
    %265 = vmatprep.subr.mxu0 0.0
    %266 = vmatpush1.msra.mxu0 0.0
    %267 = vmatprep.mubr.f32.mxu0 0.0
    %268 = vmatmul.mubr.f32.gmra.mrb[0].mxu0 %v198
    %v269 = vpop.f32.mrb[0].mxu0
    %v270 = vadd.f32 %v194, %v269
    %v271 = vpop.f32.mrb[0].mxu0
    %272 = vmatprep.mubr.f32.mxu0 0.0
    %273 = vmatmul.mubr.f32.gmra.mrb[0].mxu0 %v201
    %v274 = vpop.f32.mrb[0].mxu0
    %v275 = vadd.f32 %v194, %v274
    %v276 = vpop.f32.mrb[0].mxu0
    %277 = vdwg.mxu0
    %v278 = vmax.f32 %v270, 0.0
    %v279 = vmax.f32 %v275, 0.0
    %280 = vst.msk [vmem:[#allocation2] sm:$0xff] %vm105, %v278
    %281 = vst.msk [vmem:[#allocation2 + $0x8] sm:$0xff] %vm105, %v279
    %s282 = sld [smem:[#allocation4]]
    %p283 = scmp.gt.s32.totalorder %s282, 0
    %s284 = scalar_select %p283, %s282, 0
    %p285 = scmp.lt.s32.totalorder %s284, 15
    %s286 = scalar_select %p285, %s284, 15
    %s287 = scalar_lea.vmem [#allocation2], %s286
    %v288 = vld [vmem:[%s287] sm:$0x1]
    %vm289 = vcmask 253952
    %290 = vst.msk [vmem:[#allocation3] sm:$0x1] %vm289, %v288
    %s291 = sld [smem:[#allocation4 + $0x1]]
    %p292 = scmp.gt.s32.totalorder %s291, 0
    %s293 = scalar_select %p292, %s291, 0
    %p294 = scmp.lt.s32.totalorder %s293, 15
    %s295 = scalar_select %p294, %s293, 15
    %s296 = scalar_lea.vmem [#allocation2], %s295
    %v297 = vld [vmem:[%s296] sm:$0x1]
    %298 = vst.msk [vmem:[#allocation3 + $0x1] sm:$0x1] %vm289, %v297
    %s299 = sld [smem:[#allocation4 + $0x2]]
    %p300 = scmp.gt.s32.totalorder %s299, 0
    %s301 = scalar_select %p300, %s299, 0
    %p302 = scmp.lt.s32.totalorder %s301, 15
    %s303 = scalar_select %p302, %s301, 15
    %s304 = scalar_lea.vmem [#allocation2], %s303
    %v305 = vld [vmem:[%s304] sm:$0x1]
    %306 = vst.msk [vmem:[#allocation3 + $0x2] sm:$0x1] %vm289, %v305
    %s307 = sld [smem:[#allocation4 + $0x3]]
    %p308 = scmp.gt.s32.totalorder %s307, 0
    %s309 = scalar_select %p308, %s307, 0
    %p310 = scmp.lt.s32.totalorder %s309, 15
    %s311 = scalar_select %p310, %s309, 15
    %s312 = scalar_lea.vmem [#allocation2], %s311
    %v313 = vld [vmem:[%s312] sm:$0x1]
    %314 = vst.msk [vmem:[#allocation3 + $0x3] sm:$0x1] %vm289, %v313
    %s315 = sld [smem:[#allocation4 + $0x4]]
    %p316 = scmp.gt.s32.totalorder %s315, 0
    %s317 = scalar_select %p316, %s315, 0
    %p318 = scmp.lt.s32.totalorder %s317, 15
    %s319 = scalar_select %p318, %s317, 15
    %s320 = scalar_lea.vmem [#allocation2], %s319
    %v321 = vld [vmem:[%s320] sm:$0x1]
    %322 = vst.msk [vmem:[#allocation3 + $0x4] sm:$0x1] %vm289, %v321
    %s323 = sld [smem:[#allocation4 + $0x5]]
    %p324 = scmp.gt.s32.totalorder %s323, 0
    %s325 = scalar_select %p324, %s323, 0
    %p326 = scmp.lt.s32.totalorder %s325, 15
    %s327 = scalar_select %p326, %s325, 15
    %s328 = scalar_lea.vmem [#allocation2], %s327
    %v329 = vld [vmem:[%s328] sm:$0x1]
    %330 = vst.msk [vmem:[#allocation3 + $0x5] sm:$0x1] %vm289, %v329
    %s331 = sld [smem:[#allocation4 + $0x6]]
    %p332 = scmp.gt.s32.totalorder %s331, 0
    %s333 = scalar_select %p332, %s331, 0
    %p334 = scmp.lt.s32.totalorder %s333, 15
    %s335 = scalar_select %p334, %s333, 15
    %s336 = scalar_lea.vmem [#allocation2], %s335
    %v337 = vld [vmem:[%s336] sm:$0x1]
    %338 = vst.msk [vmem:[#allocation3 + $0x6] sm:$0x1] %vm289, %v337
    %s339 = sld [smem:[#allocation4 + $0x7]]
    %p340 = scmp.gt.s32.totalorder %s339, 0
    %s341 = scalar_select %p340, %s339, 0
    %p342 = scmp.lt.s32.totalorder %s341, 15
    %s343 = scalar_select %p342, %s341, 15
    %s344 = scalar_lea.vmem [#allocation2], %s343
    %v345 = vld [vmem:[%s344] sm:$0x1]
    %346 = vst.msk [vmem:[#allocation3 + $0x7] sm:$0x1] %vm289, %v345
    %v347 = vld [vmem:[#allocation3] sm:$0xff]
    %v348 = vsel %vm105, %v347, 0.0
    %349 = vadd.xlane.f32.xlu0 %v348
    %v350 = vpop.xlane.xlu0 %349
    %v351 = vrcp.pop 32.0
    %v352 = vmul.f32 %v350, %v351
    %v353 = vsub.f32 %v347, %v352
    %v354 = vmul.f32 %v353, %v353
    %v355 = vsel %vm105, %v354, 0.0
    %356 = vadd.xlane.f32.xlu0 %v355
    %v357 = vpop.xlane.xlu0 %356
    %v358 = vmul.f32 %v357, %v351
    %v359 = vadd.f32 %v358, 1e-05
    %v360 = vrsqrt.pop %v359
    %v361 = vmul.f32 %v353, %v360
    %v362 = vld [vmem:[%s5] sm:$0x1]
    %v364 = vlaneseq
    %v365 = vshrl.u32 %v364, 7
    %v366 = vsub.s32 0, %v365
    %v367 = vrot.slane %v362, %v366
    %v369 = vmul.f32 %v361, %v367
    %v370 = vld [vmem:[%s6] sm:$0x1]
    %v372 = vlaneseq
    %v373 = vshrl.u32 %v372, 7
    %v374 = vsub.s32 0, %v373
    %v375 = vrot.slane %v370, %v374
    %v377 = vadd.f32 %v369, %v375
    %v378 = vld [vmem:[#allocation12] sm:$0xff]
    %v379 = vld [vmem:[#allocation12 + $0x8] sm:$0xff]
    %v380 = vld [vmem:[#allocation12 + $0x10] sm:$0xff]
    %v381 = vld [vmem:[#allocation12 + $0x18] sm:$0xff]
    %v382 = vld [vmem:[%s8] sm:$0x1]
    %v384 = vlaneseq
    %v385 = vshrl.u32 %v384, 7
    %v386 = vsub.s32 0, %v385
    %v387 = vrot.slane %v382, %v386
    %v390 = vsel %vm105, %v377, 0
    %392 = vmatprep.subr.mxu0 0.0
    %393 = vmatpush1.msra.mxu0 %v378
    %394 = vmatprep.subr.mxu0 0.0
    %395 = vmatpush1.msra.mxu0 %v379
    %396 = vmatprep.subr.mxu0 0.0
    %397 = vmatpush1.msra.mxu0 %v380
    %398 = vmatprep.subr.mxu0 0.0
    %399 = vmatpush1.msra.mxu0 %v381
    %400 = vmatprep.subr.mxu0 0.0
    %401 = vmatpush1.msra.mxu0 0.0
    %402 = vmatprep.subr.mxu0 0.0
    %403 = vmatpush1.msra.mxu0 0.0
    %404 = vmatprep.subr.mxu0 0.0
    %405 = vmatpush1.msra.mxu0 0.0
    %406 = vmatprep.subr.mxu0 0.0
    %407 = vmatpush1.msra.mxu0 0.0
    %408 = vmatprep.subr.mxu0 0.0
    %409 = vmatpush1.msra.mxu0 0.0
    %410 = vmatprep.subr.mxu0 0.0
    %411 = vmatpush1.msra.mxu0 0.0
    %412 = vmatprep.subr.mxu0 0.0
    %413 = vmatpush1.msra.mxu0 0.0
    %414 = vmatprep.subr.mxu0 0.0
    %415 = vmatpush1.msra.mxu0 0.0
    %416 = vmatprep.subr.mxu0 0.0
    %417 = vmatpush1.msra.mxu0 0.0
    %418 = vmatprep.subr.mxu0 0.0
    %419 = vmatpush1.msra.mxu0 0.0
    %420 = vmatprep.subr.mxu0 0.0
    %421 = vmatpush1.msra.mxu0 0.0
    %422 = vmatprep.subr.mxu0 0.0
    %423 = vmatpush1.msra.mxu0 0.0
    %424 = vmatprep.subr.mxu0 0.0
    %425 = vmatpush1.msra.mxu0 0.0
    %426 = vmatprep.subr.mxu0 0.0
    %427 = vmatpush1.msra.mxu0 0.0
    %428 = vmatprep.subr.mxu0 0.0
    %429 = vmatpush1.msra.mxu0 0.0
    %430 = vmatprep.subr.mxu0 0.0
    %431 = vmatpush1.msra.mxu0 0.0
    %432 = vmatprep.subr.mxu0 0.0
    %433 = vmatpush1.msra.mxu0 0.0
    %434 = vmatprep.subr.mxu0 0.0
    %435 = vmatpush1.msra.mxu0 0.0
    %436 = vmatprep.subr.mxu0 0.0
    %437 = vmatpush1.msra.mxu0 0.0
    %438 = vmatprep.subr.mxu0 0.0
    %439 = vmatpush1.msra.mxu0 0.0
    %440 = vmatprep.subr.mxu0 0.0
    %441 = vmatpush1.msra.mxu0 0.0
    %442 = vmatprep.subr.mxu0 0.0
    %443 = vmatpush1.msra.mxu0 0.0
    %444 = vmatprep.subr.mxu0 0.0
    %445 = vmatpush1.msra.mxu0 0.0
    %446 = vmatprep.subr.mxu0 0.0
    %447 = vmatpush1.msra.mxu0 0.0
    %448 = vmatprep.subr.mxu0 0.0
    %449 = vmatpush1.msra.mxu0 0.0
    %450 = vmatprep.subr.mxu0 0.0
    %451 = vmatpush1.msra.mxu0 0.0
    %452 = vmatprep.subr.mxu0 0.0
    %453 = vmatpush1.msra.mxu0 0.0
    %454 = vmatprep.subr.mxu0 0.0
    %455 = vmatpush1.msra.mxu0 0.0
    %456 = vmatprep.mubr.f32.mxu0 0.0
    %457 = vmatmul.mubr.f32.gmra.mrb[0].mxu0 %v390
    %v458 = vpop.f32.mrb[0].mxu0
    %v459 = vadd.f32 %v387, %v458
    %v460 = vpop.f32.mrb[0].mxu0
    %461 = vdwg.mxu0
    %462 = vst [vmem:[#allocation14] sm:$0xff] %v459
    // Predicated region
    $region58: #{tpu_custom_call.1} parent=1 // pred_check
      _
    $region59: #{tpu_custom_call.1} parent=1 // pred_check_branch
      %464 = sbr.rel (0) target = $region61
    $region60: #{tpu_custom_call.1} parent=1 // pred_region
      %s466 = ssub.s32 128, 128
      %467 = vsyncadd [#allocation6], %s466
      %s469 = sshll.u32 [#allocation14], 4
      %s470 = int_to_ptr.vmem [resolvable:$true] %s469
      %472 = dma.vmem_to_hbm [thread:$0]  %s470, 128, %s9, [#allocation6]
    $region61: #{tpu_custom_call.1} parent=1 // pred_fallthru
      _
    // Predicated region
    $region62: #{tpu_custom_call.1} parent=1 // pred_check
      _
    $region63: #{tpu_custom_call.1} parent=1 // pred_check_branch
      %474 = sbr.rel (0) target = $region65
    $region64: #{tpu_custom_call.1} parent=1 // pred_region
      %475 = dma.done [#allocation6], 128
    $region65: #{tpu_custom_call.1} parent=1 // pred_fallthru
      _
    %476 = vsyncpa [#allocation5], 1
    %477 = vsyncpa [#allocation10], 1
    %478 = vsyncpa [#allocation13], 1
    %479 = vsyncpa [#allocation6], 1
    %480 = vsyncpa [#allocation7], 1

</llo_original>
